<compile_context>
chip_gen: v7x
topology: tpu7x:2x2x1
jax: 0.10.0
libtpu: 0.0.40
codegen_flags: <defaults>
</compile_context>

<pallas_src>
import jax
import jax.numpy as jnp
from jax.experimental import pallas as pl
from jax.experimental.pallas import tpu as pltpu

MAX_NUM_ATTRIBUTES = 8          # nuScenes attribute count; value == 8 marks "no attribute"
ATTR_LOSS_WEIGHT = 0.2
SPEED_LOSS_WEIGHT = 0.2
SMOOTH_L1_BETA = 0.05
_HALF_OVER_BETA = 0.5 / SMOOTH_L1_BETA   # compile-time constant -> single vmul

_LANE = 128
_MAX_TILE = 32768               # positions (lanes) per grid step


def _cdiv(a, b):
    return -(-a // b)


def _round_up(x, m):
    return _cdiv(x, m) * m


def _make_kernel(tile, blocks_per_core, num_pos):
    """tile: lanes per block; blocks_per_core: inner grid extent; num_pos: real P."""
    A = MAX_NUM_ATTRIBUTES

    def kernel(slab_ref, out_ref):
        # slab_ref: (12, T) f32 = [8 logit rows | centerness | speed | target_speed | target_attr]
        # out_ref:  (8, 1) f32 accumulator rows =
        #           [sum_xent, cnt_attr, sum_attr_w, sum_wl1, sum_spd_w, cnt_spd, 0, 0]
        slab = slab_ref[...]
        T = slab.shape[1]
        logits = slab[0:A, :]                          # (8, T)
        ctr = slab[A:A + 1, :]                         # (1, T) centerness_targets
        spd = slab[A + 1:A + 2, :]                     # (1, T) predicted speeds
        tspd = slab[A + 2:A + 3, :]                    # (1, T) target speeds (may be NaN)
        tgt = slab[A + 3:A + 4, :].astype(jnp.int32)   # (1, T) attribute targets (exact ints)

        # ---- tail mask: global lane index < P kills zero-pad and any OOB garbage ----
        blk = pl.program_id(0) * blocks_per_core + pl.program_id(1)
        start = blk * tile
        lane = jax.lax.broadcasted_iota(jnp.int32, (1, T), 1)
        in_range = (start + lane) < num_pos            # (1, T) bool

        valid_attr = jnp.logical_and(tgt != A, in_range)
        valid_spd = jnp.logical_and(jnp.logical_not(jnp.isnan(tspd)), in_range)

        # ---- attribute branch: log-softmax cross entropy over the sublane axis ----
        m = jnp.max(logits, axis=0, keepdims=True)     # (1, T)
        z = logits - m
        lse = jnp.log(jnp.sum(jnp.exp(z), axis=0, keepdims=True))          # (1, T)
        onehot = jax.lax.broadcasted_iota(jnp.int32, (A, T), 0) == tgt     # (A, T)
        z_sel = jnp.sum(jnp.where(onehot, z, 0.0), axis=0, keepdims=True)  # (1, T)
        ce = lse - z_sel

        # ---- speed branch: smooth-L1 ----
        tspd_safe = jnp.where(valid_spd, tspd, 0.0)
        d = jnp.abs(spd - tspd_safe)
        l1 = jnp.where(d < SMOOTH_L1_BETA, d * d * _HALF_OVER_BETA,
                       d - 0.5 * SMOOTH_L1_BETA)

        # ---- fused reductions: one (8, T) stack, one lane reduction, one store ----
        one = jnp.ones_like(ctr)
        zero = jnp.zeros_like(ctr)
        w_spd = jnp.where(valid_spd, ctr, 0.0)         # hoisted, reused for row 4
        rows = jnp.concatenate([
            jnp.where(valid_attr, ce, 0.0),            # xent numerator
            jnp.where(valid_attr, one, 0.0),           # valid-attr count
            jnp.where(valid_attr, ctr, 0.0),           # attr weight sum
            jnp.where(valid_spd, l1 * ctr, 0.0),       # weighted smooth-L1 sum
            w_spd,                                     # speed weight sum
            jnp.where(valid_spd, one, 0.0),            # valid-speed count
            zero, zero], axis=0)                       # (8, T)
        partial = jnp.sum(rows, axis=-1, keepdims=True)  # (8, 1)

        @pl.when(pl.program_id(1) == 0)
        def _():
            out_ref[...] = jnp.zeros_like(out_ref)
        out_ref[...] += partial

    return kernel


def nuscenes_loss(attr_logits_list, speeds_list, fcos2d_info, targets):
    A = MAX_NUM_ATTRIBUTES
    pos_inds = targets['pos_inds'].astype(jnp.int32)
    P = pos_inds.shape[0]
    # TODO(synk): the pos_inds.numel() == 0 branch of the reference is unreachable
    # in this static-shape version (P is a compile-time constant > 0), and the
    # dist.all_reduce(reduce_sum)/world_size path is identity for one device.

    # ---- gather the P positive rows straight from the per-level NCHW heads ------
    attr_pos = jnp.zeros((P, A), jnp.float32)
    spd_pos = jnp.zeros((P,), jnp.float32)
    offset = 0
    for x_attr, x_spd in zip(attr_logits_list, speeds_list):
        B, _, H, W = x_attr.shape
        size = B * H * W
        local = pos_inds - offset
        in_lvl = jnp.logical_and(local >= 0, local < size)
        li = jnp.clip(local, 0, size - 1)
        n = li // (H * W)
        hw = li - n * (H * W)
        h = hw // W
        w = hw - h * W
        a = x_attr[n, :, h, w].astype(jnp.float32)      # (P, A) direct NCHW gather
        s = x_spd[n, 0, h, w].astype(jnp.float32)       # (P,)
        attr_pos = jnp.where(in_lvl[:, None], a, attr_pos)
        spd_pos = jnp.where(in_lvl, s, spd_pos)
        offset += size

    tgt_attr = targets['attributes'][pos_inds].astype(jnp.float32)   # exact ints 0..8
    tgt_spd = targets['speeds'][pos_inds].astype(jnp.float32)
    ctr = fcos2d_info['centerness_targets'].astype(jnp.float32)

    # ---- one lane-dense (12, P128) slab, padded only to a multiple of 128 -------
    P128 = _round_up(P, _LANE)
    slab = jnp.concatenate([
        attr_pos.T,                 # (8, P) logits on sublanes, positions on lanes
        ctr[None, :],
        spd_pos[None, :],
        tgt_spd[None, :],
        tgt_attr[None, :],
    ], axis=0)                      # (12, P)
    if P128 != P:
        slab = jnp.pad(slab, ((0, 0), (0, P128 - P)))   # zero pad; masked in-kernel

    tile = min(_MAX_TILE, P128)
    nb = _cdiv(P128, tile)                              # real lane-blocks
    ncores = 2 if nb >= 2 else 1                        # v7x: split over both TCs
    nbc = _cdiv(nb, ncores)                             # blocks per core (virtual)

    out = pl.pallas_call(
        _make_kernel(tile, nbc, P),
        grid=(ncores, nbc),
        in_specs=[pl.BlockSpec(
            (12, tile),
            # clamp virtual out-of-range blocks (odd nb split over 2 cores) to the
            # last real block; their lanes are fully masked in-kernel anyway.
            lambda c, i, _nbc=nbc, _nb=nb: (0, jnp.minimum(c * _nbc + i, _nb - 1)))],
        out_specs=pl.BlockSpec((None, 8, 1), lambda c, i: (c, 0, 0)),
        out_shape=jax.ShapeDtypeStruct((ncores, 8, 1), jnp.float32),
        compiler_params=pltpu.CompilerParams(
            dimension_semantics=("parallel", "arbitrary")),
    )(slab)
    sums = jnp.sum(out, axis=0)                         # (8, 1): add per-core partials

    sum_xent, cnt_attr, sum_attr_w, sum_wl1, sum_spd_w, cnt_spd = [
        sums[r, 0] for r in range(6)]

    # ---- scalar bookkeeping (matches the PyTorch forward, world_size == 1) ------
    xent_mean = sum_xent / jnp.maximum(cnt_attr, 1.0)   # F.cross_entropy mean over valid
    loss_attr = jnp.where(
        cnt_attr > 0,
        ATTR_LOSS_WEIGHT * xent_mean * sum_attr_w / jnp.maximum(sum_attr_w, 1e-6),
        jnp.float32(0.0))
    loss_speed = jnp.where(
        cnt_spd > 0,
        SPEED_LOSS_WEIGHT * sum_wl1 / jnp.maximum(sum_spd_w, 1e-6),
        jnp.float32(0.0))
    return {'loss_attr': loss_attr, 'loss_speed': loss_speed}


def _reference(attr_logits_list, speeds_list, fcos2d_info, targets):
    """Pure-JAX replica of the PyTorch forward (world_size == 1)."""
    A = MAX_NUM_ATTRIBUTES
    attr_flat = jnp.concatenate(
        [jnp.transpose(x, (0, 2, 3, 1)).reshape(-1, A) for x in attr_logits_list], 0)
    spd_flat = jnp.concatenate(
        [jnp.transpose(x, (0, 2, 3, 1)).reshape(-1) for x in speeds_list], 0)
    pos = targets['pos_inds']
    w = fcos2d_info['centerness_targets']

    logits = attr_flat[pos].astype(jnp.float32)
    tgt = targets['attributes'][pos]
    vmask = tgt != A
    attr_w_sum = jnp.sum(jnp.where(vmask, w, 0.0))
    logp = jax.nn.log_softmax(logits, axis=-1)
    ce = -jnp.take_along_axis(logp, jnp.where(vmask, tgt, 0)[:, None], axis=-1)[:, 0]
    xent = jnp.sum(jnp.where(vmask, ce, 0.0)) / jnp.maximum(jnp.sum(vmask), 1).astype(jnp.float32)
    loss_attr = jnp.where(jnp.sum(vmask) > 0,
                          ATTR_LOSS_WEIGHT * xent * attr_w_sum / jnp.maximum(attr_w_sum, 1e-6),
                          0.0)

    spd = spd_flat[pos].astype(jnp.float32)
    tspd = targets['speeds'][pos]
    smask = jnp.logical_not(jnp.isnan(tspd))
    d = jnp.abs(spd - jnp.where(smask, tspd, 0.0))
    l1 = jnp.where(d < SMOOTH_L1_BETA, 0.5 * d * d / SMOOTH_L1_BETA, d - 0.5 * SMOOTH_L1_BETA)
    spd_w_sum = jnp.sum(jnp.where(smask, w, 0.0))
    loss_speed = jnp.where(jnp.sum(smask) > 0,
                           SPEED_LOSS_WEIGHT * jnp.sum(jnp.where(smask, l1 * w, 0.0))
                           / jnp.maximum(spd_w_sum, 1e-6),
                           0.0)
    return {'loss_attr': loss_attr, 'loss_speed': loss_speed}


if __name__ == "__main__":
    key = jax.random.PRNGKey(0)
    ks = jax.random.split(key, 8)

    B = 2
    A = MAX_NUM_ATTRIBUTES
    level_shapes = [(8, 8), (4, 4)]           # two small FPN levels

    attr_logits, speeds = [], []
    total = 0
    for li, (H, W) in enumerate(level_shapes):
        attr_logits.append(jax.random.normal(ks[li], (B, A, H, W), jnp.float32))
        speeds.append(jax.random.normal(ks[2 + li], (B, 1, H, W), jnp.float32))
        total += B * H * W

    P = 16
    pos_inds = jax.random.choice(ks[4], total, (P,), replace=False).astype(jnp.int32)
    # attribute targets in [0, A]; value A means "no attribute" (masked out)
    attributes = jax.random.randint(ks[5], (total,), 0, A + 1, dtype=jnp.int32)
    target_speeds = jax.random.normal(ks[6], (total,), jnp.float32)
    nan_mask = jax.random.bernoulli(ks[7], 0.25, (total,))
    target_speeds = jnp.where(nan_mask, jnp.float32(jnp.nan), target_speeds)
    centerness = jax.random.uniform(jax.random.PRNGKey(42), (P,), jnp.float32, 0.05, 1.0)

    targets = {'pos_inds': pos_inds, 'attributes': attributes, 'speeds': target_speeds}
    fcos2d_info = {'centerness_targets': centerness}

    losses = nuscenes_loss(attr_logits, speeds, fcos2d_info, targets)
    losses = jax.block_until_ready(losses)

    ref = _reference(attr_logits, speeds, fcos2d_info, targets)
    for k in ('loss_attr', 'loss_speed'):
        assert jnp.abs(losses[k] - ref[k]) < 1e-5, (k, losses[k], ref[k])

    print("KERNEL_OK")
</pallas_src>

<mosaic_0001>
module attributes {stable_mosaic.version = 11 : i64} {
  func.func @kernel(%arg0: i32, %arg1: i32, %arg2: memref<12x128xf32, #tpu.memory_space<vmem>>, %arg3: memref<1x8x1xf32, #tpu.memory_space<vmem>>) attributes {dimension_semantics = [#tpu.dimension_semantics<parallel>, #tpu.dimension_semantics<arbitrary>], iteration_bounds = array<i64: 1, 1>, scalar_prefetch = 0 : i64, scratch_operands = 0 : i64, tpu.core_type = #tpu.core_type<tc>, window_params = [{transform_indices = @transform_0, window_bounds = array<i64: 12, 128>}, {transform_indices = @transform_1, window_bounds = array<i64: 1, 8, 1>}]} {
    %c0 = arith.constant 0 : index
    %c0_0 = arith.constant 0 : index
    %0 = vector.load %arg2[%c0, %c0_0] : memref<12x128xf32, #tpu.memory_space<vmem>>, vector<12x128xf32>
    %1 = vector.extract_strided_slice %0 {offsets = [0, 0], sizes = [8, 128], strides = [1, 1]} : vector<12x128xf32> to vector<8x128xf32>
    %2 = vector.extract_strided_slice %0 {offsets = [8, 0], sizes = [1, 128], strides = [1, 1]} : vector<12x128xf32> to vector<1x128xf32>
    %3 = vector.extract_strided_slice %0 {offsets = [9, 0], sizes = [1, 128], strides = [1, 1]} : vector<12x128xf32> to vector<1x128xf32>
    %4 = vector.extract_strided_slice %0 {offsets = [10, 0], sizes = [1, 128], strides = [1, 1]} : vector<12x128xf32> to vector<1x128xf32>
    %5 = vector.extract_strided_slice %0 {offsets = [11, 0], sizes = [1, 128], strides = [1, 1]} : vector<12x128xf32> to vector<1x128xf32>
    %6 = arith.fptosi %5 : vector<1x128xf32> to vector<1x128xi32>
    %c1_i32 = arith.constant 1 : i32
    %7 = arith.muli %arg0, %c1_i32 : i32
    %8 = arith.addi %7, %arg1 : i32
    %c128_i32 = arith.constant 128 : i32
    %9 = arith.muli %8, %c128_i32 : i32
    %10 = tpu.iota {dimensions = array<i32: 1>} : vector<1x128xi32>
    %11 = vector.broadcast %9 : i32 to vector<1x128xi32>
    %12 = arith.addi %11, %10 : vector<1x128xi32>
    %c16_i32 = arith.constant 16 : i32
    %13 = vector.broadcast %c16_i32 : i32 to vector<1x128xi32>
    %14 = arith.cmpi slt, %12, %13 : vector<1x128xi32>
    %c8_i32 = arith.constant 8 : i32
    %15 = vector.broadcast %c8_i32 : i32 to vector<1x128xi32>
    %16 = arith.cmpi ne, %6, %15 : vector<1x128xi32>
    %17 = arith.andi %16, %14 : vector<1x128xi1>
    %18 = arith.cmpf one, %4, %4 : vector<1x128xf32>
    %cst = arith.constant dense<true> : vector<1x128xi1>
    %19 = arith.xori %18, %cst : vector<1x128xi1>
    %20 = arith.andi %19, %14 : vector<1x128xi1>
    %cst_1 = arith.constant dense<0xFF800000> : vector<128xf32>
    %21 = vector.multi_reduction <maximumf>, %1, %cst_1 [0] : vector<8x128xf32> to vector<128xf32>
    %22 = vector.shape_cast %21 : vector<128xf32> to vector<1x128xf32>
    %23 = vector.broadcast %22 : vector<1x128xf32> to vector<8x128xf32>
    %24 = arith.subf %1, %23 : vector<8x128xf32>
    %25 = math.exp %24 : vector<8x128xf32>
    %cst_2 = arith.constant dense<0.000000e+00> : vector<128xf32>
    %26 = vector.multi_reduction <add>, %25, %cst_2 [0] : vector<8x128xf32> to vector<128xf32>
    %27 = vector.shape_cast %26 : vector<128xf32> to vector<1x128xf32>
    %28 = math.log %27 : vector<1x128xf32>
    %29 = tpu.iota {dimensions = array<i32: 0>} : vector<8x128xi32>
    %30 = vector.broadcast %6 : vector<1x128xi32> to vector<8x128xi32>
    %31 = arith.cmpi eq, %29, %30 : vector<8x128xi32>
    %cst_3 = arith.constant 0.000000e+00 : f32
    %32 = vector.broadcast %cst_3 : f32 to vector<8x128xf32>
    %33 = arith.select %31, %24, %32 : vector<8x128xi1>, vector<8x128xf32>
    %cst_4 = arith.constant dense<0.000000e+00> : vector<128xf32>
    %34 = vector.multi_reduction <add>, %33, %cst_4 [0] : vector<8x128xf32> to vector<128xf32>
    %35 = vector.shape_cast %34 : vector<128xf32> to vector<1x128xf32>
    %36 = arith.subf %28, %35 : vector<1x128xf32>
    %cst_5 = arith.constant 0.000000e+00 : f32
    %37 = vector.broadcast %cst_5 : f32 to vector<1x128xf32>
    %38 = arith.select %20, %4, %37 : vector<1x128xi1>, vector<1x128xf32>
    %39 = arith.subf %3, %38 : vector<1x128xf32>
    %40 = math.absf %39 : vector<1x128xf32>
    %cst_6 = arith.constant 5.000000e-02 : f32
    %41 = vector.broadcast %cst_6 : f32 to vector<1x128xf32>
    %42 = arith.cmpf olt, %40, %41 : vector<1x128xf32>
    %43 = arith.mulf %40, %40 : vector<1x128xf32>
    %cst_7 = arith.constant 1.000000e+01 : f32
    %44 = vector.broadcast %cst_7 : f32 to vector<1x128xf32>
    %45 = arith.mulf %43, %44 : vector<1x128xf32>
    %cst_8 = arith.constant 2.500000e-02 : f32
    %46 = vector.broadcast %cst_8 : f32 to vector<1x128xf32>
    %47 = arith.subf %40, %46 : vector<1x128xf32>
    %48 = arith.select %42, %45, %47 : vector<1x128xi1>, vector<1x128xf32>
    %cst_9 = arith.constant 1.000000e+00 : f32
    %49 = vector.broadcast %cst_9 : f32 to vector<1x128xf32>
    %cst_10 = arith.constant 0.000000e+00 : f32
    %50 = vector.broadcast %cst_10 : f32 to vector<1x128xf32>
    %cst_11 = arith.constant 0.000000e+00 : f32
    %51 = vector.broadcast %cst_11 : f32 to vector<1x128xf32>
    %52 = arith.select %20, %2, %51 : vector<1x128xi1>, vector<1x128xf32>
    %cst_12 = arith.constant 0.000000e+00 : f32
    %53 = vector.broadcast %cst_12 : f32 to vector<1x128xf32>
    %54 = arith.select %17, %36, %53 : vector<1x128xi1>, vector<1x128xf32>
    %cst_13 = arith.constant 0.000000e+00 : f32
    %55 = vector.broadcast %cst_13 : f32 to vector<1x128xf32>
    %56 = arith.select %17, %49, %55 : vector<1x128xi1>, vector<1x128xf32>
    %cst_14 = arith.constant 0.000000e+00 : f32
    %57 = vector.broadcast %cst_14 : f32 to vector<1x128xf32>
    %58 = arith.select %17, %2, %57 : vector<1x128xi1>, vector<1x128xf32>
    %59 = arith.mulf %48, %2 : vector<1x128xf32>
    %cst_15 = arith.constant 0.000000e+00 : f32
    %60 = vector.broadcast %cst_15 : f32 to vector<1x128xf32>
    %61 = arith.select %20, %59, %60 : vector<1x128xi1>, vector<1x128xf32>
    %cst_16 = arith.constant 0.000000e+00 : f32
    %62 = vector.broadcast %cst_16 : f32 to vector<1x128xf32>
    %63 = arith.select %20, %49, %62 : vector<1x128xi1>, vector<1x128xf32>
    %64 = tpu.concatenate %54, %56, %58, %61, %52, %63, %50, %50 in 0 : vector<1x128xf32>, vector<1x128xf32>, vector<1x128xf32>, vector<1x128xf32>, vector<1x128xf32>, vector<1x128xf32>, vector<1x128xf32>, vector<1x128xf32> -> vector<8x128xf32>
    %cst_17 = arith.constant dense<0.000000e+00> : vector<8xf32>
    %65 = vector.multi_reduction <add>, %64, %cst_17 [1] : vector<8x128xf32> to vector<8xf32>
    %66 = vector.shape_cast %65 : vector<8xf32> to vector<8x1xf32>
    %c0_i32 = arith.constant 0 : i32
    %67 = arith.cmpi eq, %arg1, %c0_i32 : i32
    %68 = arith.extui %67 : i1 to i32
    %c0_i32_18 = arith.constant 0 : i32
    %69 = arith.cmpi ne, %68, %c0_i32_18 : i32
    scf.if %69 {
      %cst_25 = arith.constant 0.000000e+00 : f32
      %76 = vector.broadcast %cst_25 : f32 to vector<8x1xf32>
      %c0_26 = arith.constant 0 : index
      %c0_27 = arith.constant 0 : index
      %c0_28 = arith.constant 0 : index
      %77 = vector.load %arg3[%c0_26, %c0_27, %c0_28] : memref<1x8x1xf32, #tpu.memory_space<vmem>>, vector<1x8x1xf32>
      %78 = vector.shape_cast %77 : vector<1x8x1xf32> to vector<8x1xf32>
      %79 = vector.shape_cast %76 : vector<8x1xf32> to vector<1x8x1xf32>
      tpu.vector_store %arg3[%c0_26, %c0_27, %c0_28], %79 {strides = array<i32>} : memref<1x8x1xf32, #tpu.memory_space<vmem>>, vector<1x8x1xf32>,
    } else {
    }
    %c0_19 = arith.constant 0 : index
    %c0_20 = arith.constant 0 : index
    %c0_21 = arith.constant 0 : index
    %70 = vector.load %arg3[%c0_19, %c0_20, %c0_21] : memref<1x8x1xf32, #tpu.memory_space<vmem>>, vector<1x8x1xf32>
    %71 = vector.shape_cast %70 : vector<1x8x1xf32> to vector<8x1xf32>
    %72 = arith.addf %71, %66 : vector<8x1xf32>
    %c0_22 = arith.constant 0 : index
    %c0_23 = arith.constant 0 : index
    %c0_24 = arith.constant 0 : index
    %73 = vector.load %arg3[%c0_22, %c0_23, %c0_24] : memref<1x8x1xf32, #tpu.memory_space<vmem>>, vector<1x8x1xf32>
    %74 = vector.shape_cast %73 : vector<1x8x1xf32> to vector<8x1xf32>
    %75 = vector.shape_cast %72 : vector<8x1xf32> to vector<1x8x1xf32>
    tpu.vector_store %arg3[%c0_22, %c0_23, %c0_24], %75 {strides = array<i32>} : memref<1x8x1xf32, #tpu.memory_space<vmem>>, vector<1x8x1xf32>,
    return
  }
  func.func @transform_0(%arg0: i32, %arg1: i32) -> (i32, i32) {
    %c1_i32 = arith.constant 1 : i32
    %0 = arith.muli %arg0, %c1_i32 : i32
    %1 = arith.addi %0, %arg1 : i32
    %c0_i32 = arith.constant 0 : i32
    %2 = arith.minsi %1, %c0_i32 : i32
    %c0_i32_0 = arith.constant 0 : i32
    %c0_i32_1 = arith.constant 0 : i32
    return %c0_i32_0, %2 : i32, i32
  }
  func.func @transform_1(%arg0: i32, %arg1: i32) -> (i32, i32, i32) {
    %c0_i32 = arith.constant 0 : i32
    %c0_i32_0 = arith.constant 0 : i32
    %c0_i32_1 = arith.constant 0 : i32
    return %arg0, %c0_i32, %c0_i32_0 : i32, i32, i32
  }
}

</mosaic_0001>

<llo_original>
// kernel: tpu_custom_call.1
$region0: #{tpu_custom_call.1}
  #allocation0 [shape = 'u32[]', space=smem, size = 0x4, offset = 0x4, fixed_abs, tag = 'smem constant byte address 0x4 - core index']
  #allocation1 [shape = 'u32[144,128]{1,0:T(1,128)}', space=vmem, size = 0x12000, scoped, tag = 'internal scratch']
  %s0 = inlined_call_operand.hbm [shape: f32[12,128], index: 0, kind: input, shape index: {}]
  %s1 = inlined_call_operand.vmem [shape: f32[1,8,1], index: 1, kind: output, shape index: {}]
  %s2 = sld [smem:[#allocation0]]
  $region22: #{tpu_custom_call.1} parent=0
    _
  %s4 = ssub.s32 1, %s2
  %s5 = scalar_select 0, %s4, %s2
  $region1: #{tpu_custom_call.1} parent=0
    #allocation2 [shape = 'u8[8192]{0}', space=vmem, size = 0x2000, scoped, tag = 'input window, operand 0, single buffered']
    #allocation3 [shape = 's32[1]{0}', space=sflag, size = 0x4, scoped, tag = 'scoped memory for tpu_custom_call.1']
    %6 = vsyncpa [#allocation3], 0
    // Predicated region
    $region2: #{tpu_custom_call.1} parent=1 // pred_check
      _
    $region3: #{tpu_custom_call.1} parent=1 // pred_check_branch
      %8 = sbr.rel (0) target = $region5
    $region4: #{tpu_custom_call.1} parent=1 // pred_region
      %s9 = sadd.s32 0, 0
      %p10 = scmp.lt.s32.totalorder %s9, 0
      %s11 = scalar_select %p10, %s9, 0
      %s13 = ssub.s32 256, 256
      %14 = vsyncadd [#allocation3], %s13
      %s15 = smul.addr %s11, 128
      %s16 = scalar_lea.hbm %s0, %s15
      %s17 = sshll.u32 [#allocation2], 4
      %s18 = int_to_ptr.vmem [resolvable:$true] %s17
      %23 = dma.hbm_to_vmem [thread:$0]  %s16, 256, %s18, [#allocation3], 128, 128, 8
    $region5: #{tpu_custom_call.1} parent=1 // pred_fallthru
      _
    // Predicated region
    $region6: #{tpu_custom_call.1} parent=1 // pred_check
      _
    $region7: #{tpu_custom_call.1} parent=1 // pred_check_branch
      %25 = sbr.rel (0) target = $region9
    $region8: #{tpu_custom_call.1} parent=1 // pred_region
      %26 = dma.done [#allocation3], 256
    $region9: #{tpu_custom_call.1} parent=1 // pred_fallthru
      _
    %s27 = sadd.s32 0, 0
    %p28 = scmp.lt.s32.totalorder %s27, 0
    %s29 = scalar_select %p28, %s27, 0
    %v30 = vld [vmem:[#allocation2] sm:$0xff]
    %v31 = vld [vmem:[#allocation2 + $0x8] sm:$0xf]
    %v32 = vcvt.f32.s32.to.zero.pseudo %v31
    %s33 = sadd.s32 0, 0
    %s34 = smul.u32 %s33, 128
    %v35 = vlaneseq
    %v36 = vand.u32 %v35, 127
    %v37 = vstv %s34
    %v38 = vadd.s32 %v37, %v36
    %vm39 = vcmp.lt.s32.totalorder %v38, 16
    %vm40 = vcmp.ne.s32.totalorder %v32, 8
    %vm41 = vmand %vm40, %vm39
    %vm42 = vcmp.ne.f32.partialorder %v31, %v31
    %vm43 = vmxor %vm42, 1
    %vm44 = vmand %vm43, %vm39
    %v45 = vrot.slane %v30, 4
    %v46 = vmax.f32 %v30, %v45
    %v47 = vrot.slane %v46, 2
    %v48 = vmax.f32 %v46, %v47
    %v49 = vrot.slane %v48, 1
    %v50 = vmax.f32 %v48, %v49
    %v51 = vsub.f32 %v30, %v50
    %v52 = vmul.f32 %v51, 1.442695
    %v53 = vpow.pop %v52
    %v54 = vrot.slane %v53, 4
    %v55 = vadd.f32 %v53, %v54
    %v56 = vrot.slane %v55, 2
    %v57 = vadd.f32 %v55, %v56
    %v58 = vrot.slane %v57, 1
    %v59 = vadd.f32 %v57, %v58
    %v60 = vlog2.pop %v59
    %v61 = vmul.f32 %v60, 0.6931472
    %v62 = vlaneseq
    %v63 = vshrl.u32 %v62, 7
    %v64 = vlaneseq
    %v65 = vshrl.u32 %v64, 7
    %v66 = vsub.s32 3, %v65
    %v67 = vrot.slane %v32, %v66
    %vm68 = vcmp.eq.s32.totalorder %v63, %v67
    %v69 = vsel %vm68, %v51, 0.0
    %v70 = vrot.slane %v69, 4
    %v71 = vadd.f32 %v69, %v70
    %v72 = vrot.slane %v71, 2
    %v73 = vadd.f32 %v71, %v72
    %v74 = vrot.slane %v73, 1
    %v75 = vadd.f32 %v73, %v74
    %v76 = vsub.f32 %v61, %v75
    %v77 = vsel %vm44, %v31, 0.0
    %v79 = vrot.slane %v77, 1
    %v81 = vsub.f32 %v31, %v79
    %v82 = vand.u32 2147483647, %v81
    %vm83 = vcmp.lt.f32.partialorder %v82, 0.05
    %v84 = vmul.f32 %v82, %v82
    %v85 = vmul.f32 %v84, 10.0
    %v86 = vsub.f32 %v82, 0.025
    %v87 = vsel %vm83, %v85, %v86
    %v89 = vrot.slane %v31, 6
    %v91 = vsel %vm44, %v89, 0.0
    %v92 = vsel %vm41, %v76, 0.0
    %v93 = vsel %vm41, 1.0, 0.0
    %v94 = vrot.slane %v31, 5
    %v96 = vsel %vm41, %v94, 0.0
    %v97 = vrot.slane %v31, 7
    %v99 = vmul.f32 %v87, %v97
    %v101 = vrot.slane %v99, 7
    %v103 = vsel %vm44, %v101, 0.0
    %v104 = vsel %vm44, 1.0, 0.0
    %v106 = vrot.slane %v92, 3
    %v109 = vrot.slane %v93, 2
    %v112 = vrot.slane %v96, 1
    %v115 = vrot.slane %v103, 7
    %v118 = vrot.slane %v91, 6
    %v121 = vrot.slane %v104, 5
    %vm123 = vcmask 1040384
    %v124 = vsel %vm123, %v106, %v109
    %vm125 = vcmask 1041408
    %v126 = vsel %vm125, %v124, %v112
    %vm127 = vcmask 1042432
    %v128 = vsel %vm127, %v126, %v115
    %vm129 = vcmask 1043456
    %v130 = vsel %vm129, %v128, %v118
    %vm131 = vcmask 1044480
    %v132 = vsel %vm131, %v130, %v121
    %vm133 = vcmask 1045504
    %v134 = vsel %vm133, %v132, 0.0
    %vm135 = vcmask 1046528
    %v136 = vsel %vm135, %v134, 0.0
    %137 = vadd.xlane.f32.xlu0 %v136
    %v138 = vpop.xlane.xlu0 %137
    %p139 = scmp.eq.s32.totalorder 0, 0
    // Predicated region
    $region10: #{tpu_custom_call.1} parent=1 // pred_check
      %p140 = pneg %p139
    $region11: #{tpu_custom_call.1} parent=1 // pred_check_branch
      %142 = sbr.rel (%p140) target = $region13
    $region12: #{tpu_custom_call.1} parent=1 // pred_region
      %vm143 = vcmask 7168
      %144 = vst.msk [vmem:[%s1] sm:$0xff] %vm143, 0.0
    $region13: #{tpu_custom_call.1} parent=1 // pred_fallthru
      _
    %v145 = vld [vmem:[%s1] sm:$0xff]
    %v146 = vadd.f32 %v145, %v138
    %vm147 = vcmask 7168
    %148 = vst.msk [vmem:[%s1] sm:$0xff] %vm147, %v146
    // Predicated region
    $region14: #{tpu_custom_call.1} parent=1 // pred_check
      _
    $region15: #{tpu_custom_call.1} parent=1 // pred_check_branch
      %150 = sbr.rel (0) target = $region17
    $region16: #{tpu_custom_call.1} parent=1 // pred_region
      _
    $region17: #{tpu_custom_call.1} parent=1 // pred_fallthru
      _
    // Predicated region
    $region18: #{tpu_custom_call.1} parent=1 // pred_check
      _
    $region19: #{tpu_custom_call.1} parent=1 // pred_check_branch
      %152 = sbr.rel (0) target = $region21
    $region20: #{tpu_custom_call.1} parent=1 // pred_region
      _
    $region21: #{tpu_custom_call.1} parent=1 // pred_fallthru
      _
    %153 = vsyncpa [#allocation3], 1

</llo_original>
